<compile_context>
chip_gen: v5e
topology: v5e:2x2
jax: 0.10.0
libtpu: 0.0.40
codegen_flags: <defaults>
</compile_context>

<pallas_src>
import jax
import jax.numpy as jnp
from jax.experimental import pallas as pl
from jax.experimental.pallas import tpu as pltpu


# ----------------------------------------------------------------------------
# Pallas identity-copy kernel (pipeline parity path only).
# ----------------------------------------------------------------------------
def _identity_copy_kernel(x_ref, o_ref):
    # Single full-tile assignment; vld/vst hides under the HBM<->VMEM DMA.
    o_ref[...] = x_ref[...]


def _vmem_budget_bytes():
    """Scoped-VMEM budget for this generation (half of physical, <=64 MiB).

    v5e/v6e: 128 MiB physical -> 64 MiB budget.  v7x: 64 MiB -> 32 MiB budget.
    """
    cap = 128 * 1024 * 1024
    try:
        info = pltpu.get_tpu_info()
        cap = int(getattr(info, "vmem_capacity_bytes", cap))
    except Exception:
        pass
    return min(cap // 2, 64 * 1024 * 1024)


def _pallas_identity_copy_impl(x):
    if x.size == 0:
        return x

    orig_shape = x.shape
    itemsize = jnp.dtype(x.dtype).itemsize
    total_bytes = x.size * itemsize

    # View as (L, H, W): collapse leading dims; contiguous row-major reshape
    # is metadata-only inside jit (no HBM copy).
    if x.ndim >= 2:
        H, W = x.shape[-2], x.shape[-1]
        L = 1
        for d in x.shape[:-2]:
            L *= d
    else:
        L, H, W = 1, 1, x.size
    x3 = x.reshape(L, H, W)

    vmem_limit = _vmem_budget_bytes()
    slab_bytes = H * W * itemsize

    # Block = (tl, H, W): last two dims equal the full array dims, so the
    # (8,128) constraint is bypassed and no padding is ever required.
    # Target ~vmem_limit/5 bytes per block so 2x double-buffered (in + out)
    # buffers stay well inside the scoped budget on every generation.
    # TODO(synk): if a single (1, H, W) slab ever exceeds the VMEM budget,
    # tile the trailing dims as well (not needed for this identity module).
    target_block_bytes = max(slab_bytes, vmem_limit // 5)
    max_tl = max(1, min(L, target_block_bytes // slab_bytes))

    # v7x megacore: ensure >=2 grid steps for medium/large tensors so both
    # TensorCores participate (no-op on single-TC v5e/v6e).
    if L >= 2 and total_bytes > (1 << 20):
        max_tl = min(max_tl, max(1, L // 2))

    # Largest divisor of L that is <= max_tl: grid tiles exactly, no ragged
    # tail, no padding, no post-slice.
    tl = int(max_tl)
    while L % tl:
        tl -= 1

    grid = (L // tl,)

    out3 = pl.pallas_call(
        _identity_copy_kernel,
        out_shape=jax.ShapeDtypeStruct((L, H, W), x.dtype),
        grid_spec=pltpu.PrefetchScalarGridSpec(
            num_scalar_prefetch=0,
            grid=grid,
            in_specs=[pl.BlockSpec((tl, H, W), lambda i: (i, 0, 0))],
            out_specs=pl.BlockSpec((tl, H, W), lambda i: (i, 0, 0)),
        ),
        compiler_params=pltpu.CompilerParams(
            dimension_semantics=("parallel",),   # megacore sharding on v7x
            vmem_limit_bytes=vmem_limit,
        ),
    )(x3)

    return out3.reshape(orig_shape)


# jit so the (metadata-only) reshapes and the pallas_call live in one XLA
# computation with no extra dispatches.
_pallas_identity_copy = jax.jit(_pallas_identity_copy_impl)


# ----------------------------------------------------------------------------
# Public forward: PhysicalGuidedModel.forward(x) -> x
# ----------------------------------------------------------------------------
def physical_guided_model_forward(x, use_pallas_kernel=False):
    """Identity forward of PhysicalGuidedModel.

    Default: return x untouched (zero HBM traffic -- optimal for an identity).
    use_pallas_kernel=True routes through the Pallas copy kernel, kept only
    for pipeline-structure parity / to force a freshly materialized buffer.
    """
    if not use_pallas_kernel:
        return x
    return _pallas_identity_copy(x)


if __name__ == "__main__":
    key = jax.random.PRNGKey(0)
    # Small NCHW input consistent with an image-restoration arch.
    x = jax.random.normal(key, (2, 4, 16, 16), dtype=jnp.float32)

    # Default (optimal) path: no kernel launched, x returned as-is.
    y_fast = jax.block_until_ready(physical_guided_model_forward(x))
    assert y_fast.shape == x.shape and y_fast.dtype == x.dtype
    assert bool(jnp.all(y_fast == x))

    # Pallas kernel path (pipeline parity): run once and verify exact identity.
    y_kernel = jax.block_until_ready(
        physical_guided_model_forward(x, use_pallas_kernel=True))
    assert y_kernel.shape == x.shape and y_kernel.dtype == x.dtype
    assert bool(jnp.all(y_kernel == x))

    print("KERNEL_OK")
</pallas_src>

<mosaic_0001>
module attributes {stable_mosaic.version = 11 : i64} {
  func.func @_identity_copy_kernel(%arg0: i32, %arg1: memref<8x16x16xf32, #tpu.memory_space<vmem>>, %arg2: memref<8x16x16xf32, #tpu.memory_space<vmem>>) attributes {dimension_semantics = [#tpu.dimension_semantics<parallel>], iteration_bounds = array<i64: 1>, scalar_prefetch = 0 : i64, scratch_operands = 0 : i64, tpu.core_type = #tpu.core_type<tc>, window_params = [{transform_indices = @transform_0, window_bounds = array<i64: 8, 16, 16>}, {transform_indices = @transform_1, window_bounds = array<i64: 8, 16, 16>}]} {
    %c0 = arith.constant 0 : index
    %c0_0 = arith.constant 0 : index
    %c0_1 = arith.constant 0 : index
    %0 = vector.load %arg1[%c0, %c0_0, %c0_1] : memref<8x16x16xf32, #tpu.memory_space<vmem>>, vector<8x16x16xf32>
    %c0_2 = arith.constant 0 : index
    %c0_3 = arith.constant 0 : index
    %c0_4 = arith.constant 0 : index
    %1 = vector.load %arg2[%c0_2, %c0_3, %c0_4] : memref<8x16x16xf32, #tpu.memory_space<vmem>>, vector<8x16x16xf32>
    tpu.vector_store %arg2[%c0_2, %c0_3, %c0_4], %0 {strides = array<i32>} : memref<8x16x16xf32, #tpu.memory_space<vmem>>, vector<8x16x16xf32>,
    return
  }
  func.func @transform_0(%arg0: i32) -> (i32, i32, i32) {
    %c0_i32 = arith.constant 0 : i32
    %c0_i32_0 = arith.constant 0 : i32
    %c0_i32_1 = arith.constant 0 : i32
    return %arg0, %c0_i32, %c0_i32_0 : i32, i32, i32
  }
  func.func @transform_1(%arg0: i32) -> (i32, i32, i32) {
    %c0_i32 = arith.constant 0 : i32
    %c0_i32_0 = arith.constant 0 : i32
    %c0_i32_1 = arith.constant 0 : i32
    return %arg0, %c0_i32, %c0_i32_0 : i32, i32, i32
  }
}

</mosaic_0001>

<llo_original>
// kernel: _pallas_identity_copy_impl.1
$region0: #{_pallas_identity_copy_impl.1}
  #allocation0 [shape = 'u32[]', space=smem, size = 0x4, offset = 0x4, fixed_abs, tag = 'smem constant byte address 0x4 - core index']
  #allocation1 [shape = 'u32[72,128]{1,0:T(1,128)}', space=vmem, size = 0x9000, scoped, tag = 'internal scratch']
  %s0 = inlined_call_operand.hbm [shape: f32[8,16,16], index: 0, kind: input, shape index: {}]
  %s1 = inlined_call_operand.hbm [shape: f32[8,16,16], index: 1, kind: output, shape index: {}]
  %s2 = sld [smem:[#allocation0]]
  $region18: #{_pallas_identity_copy_impl.1} parent=0
    _
  %s4 = ssub.s32 1, %s2
  %s5 = scalar_select 0, %s4, %s2
  $region1: #{_pallas_identity_copy_impl.1} parent=0
    #allocation2 [shape = 'u8[65536]{0}', space=vmem, size = 0x10000, scoped, tag = 'input window, operand 0, single buffered']
    #allocation3 [shape = 's32[1]{0}', space=sflag, size = 0x4, scoped, tag = 'scoped memory for _pallas_identity_copy_impl.1']
    #allocation4 [shape = 's32[1]{0}', space=sflag, size = 0x4, scoped, tag = 'scoped memory for _pallas_identity_copy_impl.1']
    #allocation5 [shape = 'u8[65536]{0}', space=vmem, size = 0x10000, scoped, tag = 'output window, operand 0, single buffered']
    %6 = vsyncpa [#allocation3], 0
    %7 = vsyncpa [#allocation4], 0
    // Predicated region
    $region2: #{_pallas_identity_copy_impl.1} parent=1 // pred_check
      _
    $region3: #{_pallas_identity_copy_impl.1} parent=1 // pred_check_branch
      %9 = sbr.rel (0) target = $region5
    $region4: #{_pallas_identity_copy_impl.1} parent=1 // pred_region
      %11 = vsyncadd [#allocation3], 0
      %s12 = sshll.u32 %s0, 4
      %s13 = int_to_ptr.hbm [resolvable:$true] %s12
      %s14 = sshll.u32 [#allocation2], 4
      %s15 = int_to_ptr.vmem [resolvable:$true] %s14
      %20 = dma.hbm_to_vmem [thread:$0]  %s13, 2048, %s15, [#allocation3], 128, 128, 8
    $region5: #{_pallas_identity_copy_impl.1} parent=1 // pred_fallthru
      _
    // Predicated region
    $region6: #{_pallas_identity_copy_impl.1} parent=1 // pred_check
      _
    $region7: #{_pallas_identity_copy_impl.1} parent=1 // pred_check_branch
      %22 = sbr.rel (0) target = $region9
    $region8: #{_pallas_identity_copy_impl.1} parent=1 // pred_region
      %24 = dma.done [#allocation3], 2048
    $region9: #{_pallas_identity_copy_impl.1} parent=1 // pred_fallthru
      _
    %v25 = vld [vmem:[#allocation2] sm:$0xff]
    %v26 = vld [vmem:[#allocation2 + $0x8] sm:$0xff]
    %v27 = vld [vmem:[#allocation2 + $0x10] sm:$0xff]
    %v28 = vld [vmem:[#allocation2 + $0x18] sm:$0xff]
    %v29 = vld [vmem:[#allocation2 + $0x20] sm:$0xff]
    %v30 = vld [vmem:[#allocation2 + $0x28] sm:$0xff]
    %v31 = vld [vmem:[#allocation2 + $0x30] sm:$0xff]
    %v32 = vld [vmem:[#allocation2 + $0x38] sm:$0xff]
    %v33 = vld [vmem:[#allocation2 + $0x40] sm:$0xff]
    %v34 = vld [vmem:[#allocation2 + $0x48] sm:$0xff]
    %v35 = vld [vmem:[#allocation2 + $0x50] sm:$0xff]
    %v36 = vld [vmem:[#allocation2 + $0x58] sm:$0xff]
    %v37 = vld [vmem:[#allocation2 + $0x60] sm:$0xff]
    %v38 = vld [vmem:[#allocation2 + $0x68] sm:$0xff]
    %v39 = vld [vmem:[#allocation2 + $0x70] sm:$0xff]
    %v40 = vld [vmem:[#allocation2 + $0x78] sm:$0xff]
    %vm41 = vcmask 130048
    %42 = vst.msk [vmem:[#allocation5] sm:$0xff] %vm41, %v25
    %43 = vst.msk [vmem:[#allocation5 + $0x8] sm:$0xff] %vm41, %v26
    %44 = vst.msk [vmem:[#allocation5 + $0x10] sm:$0xff] %vm41, %v27
    %45 = vst.msk [vmem:[#allocation5 + $0x18] sm:$0xff] %vm41, %v28
    %46 = vst.msk [vmem:[#allocation5 + $0x20] sm:$0xff] %vm41, %v29
    %47 = vst.msk [vmem:[#allocation5 + $0x28] sm:$0xff] %vm41, %v30
    %48 = vst.msk [vmem:[#allocation5 + $0x30] sm:$0xff] %vm41, %v31
    %49 = vst.msk [vmem:[#allocation5 + $0x38] sm:$0xff] %vm41, %v32
    %50 = vst.msk [vmem:[#allocation5 + $0x40] sm:$0xff] %vm41, %v33
    %51 = vst.msk [vmem:[#allocation5 + $0x48] sm:$0xff] %vm41, %v34
    %52 = vst.msk [vmem:[#allocation5 + $0x50] sm:$0xff] %vm41, %v35
    %53 = vst.msk [vmem:[#allocation5 + $0x58] sm:$0xff] %vm41, %v36
    %54 = vst.msk [vmem:[#allocation5 + $0x60] sm:$0xff] %vm41, %v37
    %55 = vst.msk [vmem:[#allocation5 + $0x68] sm:$0xff] %vm41, %v38
    %56 = vst.msk [vmem:[#allocation5 + $0x70] sm:$0xff] %vm41, %v39
    %57 = vst.msk [vmem:[#allocation5 + $0x78] sm:$0xff] %vm41, %v40
    // Predicated region
    $region10: #{_pallas_identity_copy_impl.1} parent=1 // pred_check
      _
    $region11: #{_pallas_identity_copy_impl.1} parent=1 // pred_check_branch
      %59 = sbr.rel (0) target = $region13
    $region12: #{_pallas_identity_copy_impl.1} parent=1 // pred_region
      %61 = vsyncadd [#allocation4], 0
      %s62 = sshll.u32 [#allocation5], 4
      %s63 = int_to_ptr.vmem [resolvable:$true] %s62
      %s64 = sshll.u32 %s1, 4
      %s65 = int_to_ptr.hbm [resolvable:$true] %s64
      %70 = dma.vmem_to_hbm [thread:$0]  %s63, 2048, %s65, [#allocation4], 128, 128, 8
    $region13: #{_pallas_identity_copy_impl.1} parent=1 // pred_fallthru
      _
    // Predicated region
    $region14: #{_pallas_identity_copy_impl.1} parent=1 // pred_check
      _
    $region15: #{_pallas_identity_copy_impl.1} parent=1 // pred_check_branch
      %72 = sbr.rel (0) target = $region17
    $region16: #{_pallas_identity_copy_impl.1} parent=1 // pred_region
      %74 = dma.done [#allocation4], 2048
    $region17: #{_pallas_identity_copy_impl.1} parent=1 // pred_fallthru
      _
    %75 = vsyncpa [#allocation3], 1
    %76 = vsyncpa [#allocation4], 1

</llo_original>
